<compile_context>
chip_gen: v6e
topology: v6e:2x2x1
jax: 0.10.0
libtpu: 0.0.40
codegen_flags: <defaults>
</compile_context>

<pallas_src>
import functools

import jax
import jax.numpy as jnp
from jax import lax
from jax.experimental import pallas as pl
from jax.experimental.pallas import tpu as pltpu


def _round_up(x, m):
    return (x + m - 1) // m * m


def _sepconv_bn_relu_kernel(x_ref, w_ref, b_ref, o_ref, lhs_ref, *,
                            nb, H, W, Cin, K, dilation, padding, Ho, BS):
    # x_ref   : (nb*H, W*Cin)    f32   input rows, lane = w*Cin + ci
    # w_ref   : (K*BS, Wo*Cout)  bf16  fused dw*pw*BN-scale weight; each band
    #                                  slot zero-row-padded to BS lanes
    # b_ref   : (1, Wo*Cout)     f32   BN bias tiled over w
    # o_ref   : (nb*Ho, Wo*Cout)       lane-dense output rows
    # lhs_ref : (nb, Ho, K*BS)   bf16  K vertical-tap bands, 128-aligned slots
    wc = W * Cin
    dt = lhs_ref.dtype

    x = x_ref[...].astype(dt).reshape(nb, H, wc)

    # Stage the K vertical taps side by side along the lane axis, one store
    # per tap over the whole batch.  Output row h of band kh holds input row
    # (h + kh*dil - padding); out-of-range rows and the lane tail [wc, BS)
    # are zero-filled in-register so the store is full-slot and unmasked.
    for kh in range(K):
        h0 = max(0, padding - kh * dilation)            # first valid out row
        h1 = min(Ho, H + padding - kh * dilation)       # one past last valid
        s0 = h0 + kh * dilation - padding               # matching source row
        parts = []
        if h0 > 0:
            parts.append(jnp.zeros((nb, h0, wc), dt))
        parts.append(x[:, s0:s0 + (h1 - h0), :])
        if h1 < Ho:
            parts.append(jnp.zeros((nb, Ho - h1, wc), dt))
        band = parts[0] if len(parts) == 1 else jnp.concatenate(parts, axis=1)
        if BS > wc:
            band = jnp.concatenate(
                [band, jnp.zeros((nb, Ho, BS - wc), dt)], axis=-1)
        lhs_ref[:, :, kh * BS:(kh + 1) * BS] = band      # aligned, unmasked

    # ONE MXU matmul = depthwise conv + pointwise conv + BN scale (f32 acc).
    lhs = lhs_ref[...].reshape(nb * Ho, K * BS)
    z = jnp.dot(lhs, w_ref[...], preferred_element_type=jnp.float32)

    # BN bias + ReLU (only remaining VPU work), lane-dense store.
    o_ref[...] = jnp.maximum(z + b_ref[...], 0.0).astype(o_ref.dtype)


def separable_conv2d_bn_relu(x_nchw, w_dw, w_pw, gamma, beta,
                             running_mean, running_var, *, stride=1,
                             padding=0, dilation=1, eps=1e-5,
                             images_per_block=None):
    """x_nchw: (N,Cin,H,W). w_dw: (Cin,1,K,K). w_pw: (Cout,Cin,1,1)."""
    assert stride == 1, "stride > 1 not implemented"
    N, Cin, H, W = x_nchw.shape
    K = w_dw.shape[-1]
    Cout = w_pw.shape[0]
    Ho = H + 2 * padding - dilation * (K - 1)
    Wo = W + 2 * padding - dilation * (K - 1)

    # Band-slot lane width: each vertical tap's lanes padded up to a multiple
    # of 128 so band offsets and the contraction dim are lane-aligned.
    BS = _round_up(W * Cin, 128)

    if images_per_block is None:
        # >= 2 grid steps when the batch allows it (v7x has 2 TensorCores and
        # a 1-step grid also gives the pipeline nothing to overlap).  For
        # larger batches raise images_per_block so nb*Ho approaches 256
        # (v6e/v7x MXU height) while keeping >= 2 steps.
        images_per_block = 1 if N > 1 else N
    nb = images_per_block
    assert N % nb == 0

    # ---- host-side constant folding (zero per-element cost at run time) ----
    scale = gamma / jnp.sqrt(running_var + eps)                     # (Cout,)
    bias = beta - running_mean * scale                              # (Cout,)
    wd = jnp.transpose(w_dw[:, 0, :, :], (1, 2, 0))                 # (K,K,Cin)
    wp_s = jnp.transpose(w_pw[:, :, 0, 0], (1, 0)) * scale[None]    # (Cin,Cout)

    # Banded fused weight with the WIDTH zero-padding folded in: row index
    # (kh, wx, ci) over the UNPADDED width wx in [0, W), column (w, co).
    kw_i = jnp.arange(K)[:, None, None]
    wx_i = jnp.arange(W)[None, :, None]
    w_i = jnp.arange(Wo)[None, None, :]
    sel = (wx_i + padding == w_i + kw_i * dilation).astype(jnp.float32)  # (K,W,Wo)
    w_fused = jnp.einsum('xvw,yxc,co->yvcwo', sel, wd, wp_s)   # (K,W,Cin,Wo,Cout)
    w_fused = w_fused.reshape(K, W * Cin, Wo * Cout)
    # Zero rows matching the lane padding of each band slot, then flatten.
    w_fused = jnp.pad(w_fused, ((0, 0), (0, BS - W * Cin), (0, 0)))
    w_fused = w_fused.reshape(K * BS, Wo * Cout).astype(jnp.bfloat16)
    bias_row = jnp.tile(bias.reshape(1, Cout), (1, Wo)).astype(jnp.float32)

    # Fail fast: the banded weight only makes sense for small W / channel
    # counts (production sizes need the dense im2col form, see TODO above).
    w_bytes = 2 * K * BS * Wo * Cout
    lhs_bytes = 2 * nb * Ho * K * BS
    assert w_bytes + lhs_bytes < 8 * 1024 * 1024, (
        "banded fused weight / LHS staging too large for VMEM; "
        "switch to the dense im2col formulation")

    # NCHW -> NHWC (channels minor), then a FREE reshape to a lane-dense 2-D
    # slab.  Only the transposes forced by the NCHW interface remain.
    x2 = jnp.transpose(x_nchw, (0, 2, 3, 1)).reshape(N * H, W * Cin)

    kernel = functools.partial(
        _sepconv_bn_relu_kernel, nb=nb, H=H, W=W, Cin=Cin, K=K,
        dilation=dilation, padding=padding, Ho=Ho, BS=BS)

    out2 = pl.pallas_call(
        kernel,
        out_shape=jax.ShapeDtypeStruct((N * Ho, Wo * Cout), x_nchw.dtype),
        grid_spec=pltpu.PrefetchScalarGridSpec(
            num_scalar_prefetch=0,
            grid=(N // nb,),
            in_specs=[
                pl.BlockSpec((nb * H, W * Cin), lambda b: (b, 0)),
                pl.BlockSpec((K * BS, Wo * Cout), lambda b: (0, 0)),
                pl.BlockSpec((1, Wo * Cout), lambda b: (0, 0)),
            ],
            out_specs=pl.BlockSpec((nb * Ho, Wo * Cout), lambda b: (b, 0)),
            scratch_shapes=[
                pltpu.VMEM((nb, Ho, K * BS), jnp.bfloat16),
            ],
        ),
        compiler_params=pltpu.CompilerParams(
            dimension_semantics=("parallel",)),
    )(x2, w_fused, bias_row)

    # (N*Ho, Wo*Cout) -> NCHW.  The reshape is free; the single transpose is
    # required only to honor the PyTorch NCHW interface.
    return jnp.transpose(out2.reshape(N, Ho, Wo, Cout), (0, 3, 1, 2))


def _reference(x, w_dw, w_pw, gamma, beta, mean, var, *, stride=1, padding=0,
               dilation=1, eps=1e-5):
    Cin = x.shape[1]
    prec = lax.Precision.HIGHEST
    y = lax.conv_general_dilated(
        x, w_dw, (stride, stride),
        [(padding, padding), (padding, padding)],
        rhs_dilation=(dilation, dilation),
        dimension_numbers=("NCHW", "OIHW", "NCHW"),
        feature_group_count=Cin, precision=prec)
    y = lax.conv_general_dilated(
        y, w_pw, (1, 1), "VALID",
        dimension_numbers=("NCHW", "OIHW", "NCHW"), precision=prec)
    inv = gamma / jnp.sqrt(var + eps)
    y = (y - mean[None, :, None, None]) * inv[None, :, None, None]
    y = y + beta[None, :, None, None]
    return jnp.maximum(y, 0.0)


if __name__ == "__main__":
    # module config: in_channels=4, out_channels=8, kernel_size=3, padding=1
    N, Cin, H, W = 2, 4, 16, 16
    Cout, K, pad, dil = 8, 3, 1, 1

    key = jax.random.PRNGKey(0)
    k1, k2, k3, k4, k5, k6, k7 = jax.random.split(key, 7)

    x = jax.random.normal(k1, (N, Cin, H, W), jnp.float32)
    w_dw = jax.random.normal(k2, (Cin, 1, K, K), jnp.float32) * 0.2
    w_pw = jax.random.normal(k3, (Cout, Cin, 1, 1), jnp.float32) * 0.2
    gamma = jax.random.normal(k4, (Cout,), jnp.float32) * 0.1 + 1.0
    beta = jax.random.normal(k5, (Cout,), jnp.float32) * 0.1
    running_mean = jax.random.normal(k6, (Cout,), jnp.float32) * 0.1
    running_var = jnp.abs(jax.random.normal(k7, (Cout,), jnp.float32)) * 0.2 + 0.8

    out = separable_conv2d_bn_relu(
        x, w_dw, w_pw, gamma, beta, running_mean, running_var,
        stride=1, padding=pad, dilation=dil)
    out = jax.block_until_ready(out)

    ref = _reference(x, w_dw, w_pw, gamma, beta, running_mean, running_var,
                     stride=1, padding=pad, dilation=dil)

    assert out.shape == (N, Cout, H, W), out.shape
    # Tolerance covers the explicit bf16 staging of LHS/weight (f32 MXU
    # accumulation); a layout/weight-folding bug would show up as O(1) errors.
    max_err = float(jnp.max(jnp.abs(out - ref)))
    assert jnp.allclose(out, ref, atol=3e-2, rtol=3e-2), max_err
    print("KERNEL_OK")
</pallas_src>

<mosaic_0001>
module attributes {stable_mosaic.version = 11 : i64} {
  func.func @_sepconv_bn_relu_kernel(%arg0: i32, %arg1: memref<16x64xf32, #tpu.memory_space<vmem>>, %arg2: memref<384x128xbf16, #tpu.memory_space<vmem>>, %arg3: memref<1x128xf32, #tpu.memory_space<vmem>>, %arg4: memref<16x128xf32, #tpu.memory_space<vmem>>, %arg5: memref<1x16x384xbf16, #tpu.memory_space<vmem>>) attributes {dimension_semantics = [#tpu.dimension_semantics<parallel>], iteration_bounds = array<i64: 2>, scalar_prefetch = 0 : i64, scratch_operands = 1 : i64, tpu.core_type = #tpu.core_type<tc>, window_params = [{transform_indices = @transform_0, window_bounds = array<i64: 16, 64>}, {pipeline_mode = #tpu.pipeline_mode<synchronous>, transform_indices = @transform_1, window_bounds = array<i64: 384, 128>}, {pipeline_mode = #tpu.pipeline_mode<synchronous>, transform_indices = @transform_2, window_bounds = array<i64: 1, 128>}, {transform_indices = @transform_3, window_bounds = array<i64: 16, 128>}]} {
    %c0 = arith.constant 0 : index
    %c0_0 = arith.constant 0 : index
    %0 = vector.load %arg1[%c0, %c0_0] : memref<16x64xf32, #tpu.memory_space<vmem>>, vector<16x64xf32>
    %1 = arith.truncf %0 : vector<16x64xf32> to vector<16x64xbf16>
    %2 = vector.shape_cast %1 : vector<16x64xbf16> to vector<1x16x64xbf16>
    %cst = arith.constant 0.000000e+00 : bf16
    %3 = vector.broadcast %cst : bf16 to vector<1x1x64xbf16>
    %4 = vector.extract_strided_slice %2 {offsets = [0, 0, 0], sizes = [1, 15, 64], strides = [1, 1, 1]} : vector<1x16x64xbf16> to vector<1x15x64xbf16>
    %5 = tpu.concatenate %3, %4 in 1 : vector<1x1x64xbf16>, vector<1x15x64xbf16> -> vector<1x16x64xbf16>
    %cst_1 = arith.constant 0.000000e+00 : bf16
    %6 = vector.broadcast %cst_1 : bf16 to vector<1x16x64xbf16>
    %7 = tpu.concatenate %5, %6 in 2 : vector<1x16x64xbf16>, vector<1x16x64xbf16> -> vector<1x16x128xbf16>
    %c0_2 = arith.constant 0 : index
    %c0_3 = arith.constant 0 : index
    %c0_4 = arith.constant 0 : index
    %8 = vector.load %arg5[%c0_2, %c0_3, %c0_4] : memref<1x16x384xbf16, #tpu.memory_space<vmem>>, vector<1x16x128xbf16>
    tpu.vector_store %arg5[%c0_2, %c0_3, %c0_4], %7 {strides = array<i32>} : memref<1x16x384xbf16, #tpu.memory_space<vmem>>, vector<1x16x128xbf16>,
    %cst_5 = arith.constant 0.000000e+00 : bf16
    %9 = vector.broadcast %cst_5 : bf16 to vector<1x16x64xbf16>
    %10 = tpu.concatenate %2, %9 in 2 : vector<1x16x64xbf16>, vector<1x16x64xbf16> -> vector<1x16x128xbf16>
    %c0_6 = arith.constant 0 : index
    %c0_7 = arith.constant 0 : index
    %c128 = arith.constant 128 : index
    %11 = vector.load %arg5[%c0_6, %c0_7, %c128] : memref<1x16x384xbf16, #tpu.memory_space<vmem>>, vector<1x16x128xbf16>
    tpu.vector_store %arg5[%c0_6, %c0_7, %c128], %10 {strides = array<i32>} : memref<1x16x384xbf16, #tpu.memory_space<vmem>>, vector<1x16x128xbf16>,
    %12 = vector.extract_strided_slice %2 {offsets = [0, 1, 0], sizes = [1, 15, 64], strides = [1, 1, 1]} : vector<1x16x64xbf16> to vector<1x15x64xbf16>
    %cst_8 = arith.constant 0.000000e+00 : bf16
    %13 = vector.broadcast %cst_8 : bf16 to vector<1x1x64xbf16>
    %14 = tpu.concatenate %12, %13 in 1 : vector<1x15x64xbf16>, vector<1x1x64xbf16> -> vector<1x16x64xbf16>
    %cst_9 = arith.constant 0.000000e+00 : bf16
    %15 = vector.broadcast %cst_9 : bf16 to vector<1x16x64xbf16>
    %16 = tpu.concatenate %14, %15 in 2 : vector<1x16x64xbf16>, vector<1x16x64xbf16> -> vector<1x16x128xbf16>
    %c0_10 = arith.constant 0 : index
    %c0_11 = arith.constant 0 : index
    %c256 = arith.constant 256 : index
    %17 = vector.load %arg5[%c0_10, %c0_11, %c256] : memref<1x16x384xbf16, #tpu.memory_space<vmem>>, vector<1x16x128xbf16>
    tpu.vector_store %arg5[%c0_10, %c0_11, %c256], %16 {strides = array<i32>} : memref<1x16x384xbf16, #tpu.memory_space<vmem>>, vector<1x16x128xbf16>,
    %c0_12 = arith.constant 0 : index
    %c0_13 = arith.constant 0 : index
    %c0_14 = arith.constant 0 : index
    %18 = vector.load %arg5[%c0_12, %c0_13, %c0_14] : memref<1x16x384xbf16, #tpu.memory_space<vmem>>, vector<1x16x384xbf16>
    %19 = vector.shape_cast %18 : vector<1x16x384xbf16> to vector<16x384xbf16>
    %c0_15 = arith.constant 0 : index
    %c0_16 = arith.constant 0 : index
    %20 = vector.load %arg2[%c0_15, %c0_16] : memref<384x128xbf16, #tpu.memory_space<vmem>>, vector<384x128xbf16>
    %cst_17 = arith.constant dense<0.000000e+00> : vector<16x128xf32>
    %21 = tpu.matmul %19, %20, %cst_17 {dimension_numbers = #tpu.dot_dimension_numbers<[1], [0], [0], [1], [0, 0, 1, 1], [], []>} : vector<16x384xbf16>, vector<384x128xbf16>, vector<16x128xf32> -> vector<16x128xf32>
    %c0_18 = arith.constant 0 : index
    %c0_19 = arith.constant 0 : index
    %22 = vector.load %arg3[%c0_18, %c0_19] : memref<1x128xf32, #tpu.memory_space<vmem>>, vector<1x128xf32>
    %23 = vector.broadcast %22 : vector<1x128xf32> to vector<16x128xf32>
    %24 = arith.addf %21, %23 : vector<16x128xf32>
    %cst_20 = arith.constant 0.000000e+00 : f32
    %25 = vector.broadcast %cst_20 : f32 to vector<16x128xf32>
    %26 = arith.maximumf %24, %25 : vector<16x128xf32>
    %c0_21 = arith.constant 0 : index
    %c0_22 = arith.constant 0 : index
    %27 = vector.load %arg4[%c0_21, %c0_22] : memref<16x128xf32, #tpu.memory_space<vmem>>, vector<16x128xf32>
    tpu.vector_store %arg4[%c0_21, %c0_22], %26 {strides = array<i32>} : memref<16x128xf32, #tpu.memory_space<vmem>>, vector<16x128xf32>,
    return
  }
  func.func @transform_0(%arg0: i32) -> (i32, i32) {
    %c0_i32 = arith.constant 0 : i32
    %c0_i32_0 = arith.constant 0 : i32
    return %arg0, %c0_i32 : i32, i32
  }
  func.func @transform_1(%arg0: i32) -> (i32, i32) {
    %c0_i32 = arith.constant 0 : i32
    %c0_i32_0 = arith.constant 0 : i32
    %c0_i32_1 = arith.constant 0 : i32
    return %c0_i32, %c0_i32_0 : i32, i32
  }
  func.func @transform_2(%arg0: i32) -> (i32, i32) {
    %c0_i32 = arith.constant 0 : i32
    %c0_i32_0 = arith.constant 0 : i32
    %c0_i32_1 = arith.constant 0 : i32
    return %c0_i32, %c0_i32_0 : i32, i32
  }
  func.func @transform_3(%arg0: i32) -> (i32, i32) {
    %c0_i32 = arith.constant 0 : i32
    %c0_i32_0 = arith.constant 0 : i32
    return %arg0, %c0_i32 : i32, i32
  }
}

</mosaic_0001>

<llo_original>
// kernel: tpu_custom_call.1
$region0: #{tpu_custom_call.1}
  #allocation0 [shape = 'u32[]', space=smem, size = 0x4, offset = 0x4, fixed_abs, tag = 'smem constant byte address 0x4 - core index']
  #allocation1 [shape = 'u32[144,128]{1,0:T(1,128)}', space=vmem, size = 0x12000, scoped, tag = 'internal scratch']
  #allocation2 [shape = 'bf16[1,16,384]{2,1,0:T(8,128)(2,1)}', space=vmem, size = 0x3000, scoped, tag = 'scratch operand']
  %s0 = inlined_call_operand.hbm [shape: f32[32,64], index: 0, kind: input, shape index: {}]
  %s1 = inlined_call_operand.hbm [shape: bf16[384,128], index: 1, kind: input, shape index: {}]
  %s2 = inlined_call_operand.vmem [shape: f32[1,128], index: 2, kind: input, shape index: {}]
  %s3 = inlined_call_operand.hbm [shape: f32[32,128], index: 3, kind: output, shape index: {}]
  %s4 = sld [smem:[#allocation0]]
  $region53: #{tpu_custom_call.1} parent=0
    _
  %s6 = ssub.s32 1, %s4
  %s7 = scalar_select 0, %s6, %s4
  $region1: #{tpu_custom_call.1} parent=0
    #allocation3 [shape = 'u8[16384]{0}', space=vmem, size = 0x4000, scoped, tag = 'input window, operand 0']
    #allocation4 [shape = 's32[2]{0}', space=sflag, size = 0x8, scoped, tag = 'scoped memory for tpu_custom_call.1']
    #allocation5 [shape = 's32[2]{0}', space=sflag, size = 0x8, scoped, tag = 'scoped memory for tpu_custom_call.1']
    #allocation6 [shape = 'u8[98304]{0}', space=vmem, size = 0x18000, scoped, tag = 'input window, operand 1, single buffered']
    #allocation7 [shape = 's32[1]{0}', space=sflag, size = 0x4, scoped, tag = 'scoped memory for tpu_custom_call.1']
    #allocation8 [shape = 'u8[16384]{0}', space=vmem, size = 0x4000, scoped, tag = 'output window, operand 0']
    %8 = vsyncpa [#allocation4], 0
    %s9 = scalar_lea.sflag [#allocation4], 1
    %10 = vsyncpa %s9, 0
    %11 = vsyncpa [#allocation7], 0
    %12 = vsyncpa [#allocation5], 0
    %s13 = scalar_lea.sflag [#allocation5], 1
    %14 = vsyncpa %s13, 0
    loop: start=0, step=1, limit=4
    $region2: #{tpu_custom_call.1} parent=1 // loop_pre_header
      _
    $region3: #{tpu_custom_call.1} parent=1 // loop_header
      %s16 = sphi 0, %s20
      %p17 = scmp.ge.s32.totalorder %s16, 4
      %s26 = sphi 0, %s28
      %s29 = sphi 0, %s26
      %s30 = sphi 0, %s29
      %s46 = sphi 0, %s30
      %s50 = sphi 0, %s50
      %s52 = sphi 0, %s50
      %s53 = sphi 0, %s52
      %s67 = sphi 0, %s53
      %s71 = sphi 0, %s71
      %s73 = sphi 0, %s71
      %s74 = sphi 0, %s73
      %s88 = sphi 0, %s74
      %s94 = sphi 0, %s96
      %s97 = sphi 0, %s94
      %s98 = sphi 0, %s97
      %s114 = sphi 0, %s98
    $region4: #{tpu_custom_call.1} parent=1 // loop_header_branch
      %19 = sbr.rel (%p17) target = $region8
    $region5: #{tpu_custom_call.1} parent=1 // loop_body
      %s21 = ssub.s32 %s16, 1
      %s22 = ssub.s32 %s16, 2
      %s23 = sadd.s32 %s16, 1
      %s24 = ssub.s32 %s16, %s23
      %p25 = scmp.eq.s32.totalorder %s24, 0
      %s27 = sadd.s32 %s26, 1
      %s28 = scalar_select %p25, %s26, %s27
      %p31 = pneg %p25
      %p32 = scmp.eq.s32.totalorder %s16, 1
      %p33 = por %p31, %p32
      %p34 = scmp.ne.s32.totalorder %s26, %s29
      %p35 = scmp.eq.s32.totalorder %s16, 0
      %p36 = por %p34, %p35
      %p37 = scmp.ne.s32.totalorder %s26, %s29
      %p38 = scmp.eq.s32.totalorder %s21, 1
      %p39 = por %p37, %p38
      %p40 = scmp.ne.s32.totalorder %s29, %s30
      %p41 = scmp.eq.s32.totalorder %s21, 0
      %p42 = por %p40, %p41
      %p43 = scmp.ne.s32.totalorder %s29, %s30
      %p44 = scmp.eq.s32.totalorder %s22, 1
      %p45 = por %p43, %p44
      %p47 = scmp.ne.s32.totalorder %s30, %s46
      %p48 = scmp.eq.s32.totalorder %s22, 0
      %p49 = por %p47, %p48
      %s51 = sadd.s32 %s50, 1
      %p54 = scmp.eq.s32.totalorder %s16, 1
      %p55 = scmp.ne.s32.totalorder %s50, %s52
      %p56 = scmp.eq.s32.totalorder %s16, 0
      %p57 = por %p55, %p56
      %p58 = scmp.ne.s32.totalorder %s50, %s52
      %p59 = scmp.eq.s32.totalorder %s21, 1
      %p60 = por %p58, %p59
      %p61 = scmp.ne.s32.totalorder %s52, %s53
      %p62 = scmp.eq.s32.totalorder %s21, 0
      %p63 = por %p61, %p62
      %p64 = scmp.ne.s32.totalorder %s52, %s53
      %p65 = scmp.eq.s32.totalorder %s22, 1
      %p66 = por %p64, %p65
      %p68 = scmp.ne.s32.totalorder %s53, %s67
      %p69 = scmp.eq.s32.totalorder %s22, 0
      %p70 = por %p68, %p69
      %s72 = sadd.s32 %s71, 1
      %p75 = scmp.eq.s32.totalorder %s16, 1
      %p76 = scmp.ne.s32.totalorder %s71, %s73
      %p77 = scmp.eq.s32.totalorder %s16, 0
      %p78 = por %p76, %p77
      %p79 = scmp.ne.s32.totalorder %s71, %s73
      %p80 = scmp.eq.s32.totalorder %s21, 1
      %p81 = por %p79, %p80
      %p82 = scmp.ne.s32.totalorder %s73, %s74
      %p83 = scmp.eq.s32.totalorder %s21, 0
      %p84 = por %p82, %p83
      %p85 = scmp.ne.s32.totalorder %s73, %s74
      %p86 = scmp.eq.s32.totalorder %s22, 1
      %p87 = por %p85, %p86
      %p89 = scmp.ne.s32.totalorder %s74, %s88
      %p90 = scmp.eq.s32.totalorder %s22, 0
      %p91 = por %p89, %p90
      %s92 = ssub.s32 %s16, %s23
      %p93 = scmp.eq.s32.totalorder %s92, 0
      %s95 = sadd.s32 %s94, 1
      %s96 = scalar_select %p93, %s94, %s95
      %p99 = pneg %p93
      %p100 = scmp.eq.s32.totalorder %s16, 1
      %p101 = por %p99, %p100
      %p102 = scmp.ne.s32.totalorder %s94, %s97
      %p103 = scmp.eq.s32.totalorder %s16, 0
      %p104 = por %p102, %p103
      %p105 = scmp.ne.s32.totalorder %s94, %s97
      %p106 = scmp.eq.s32.totalorder %s21, 1
      %p107 = por %p105, %p106
      %p108 = scmp.ne.s32.totalorder %s97, %s98
      %p109 = scmp.eq.s32.totalorder %s21, 0
      %p110 = por %p108, %p109
      %p111 = scmp.ne.s32.totalorder %s97, %s98
      %p112 = scmp.eq.s32.totalorder %s22, 1
      %p113 = por %p111, %p112
      %p115 = scmp.ne.s32.totalorder %s98, %s114
      %p116 = scmp.eq.s32.totalorder %s22, 0
      %p117 = por %p115, %p116
      %p118 = scmp.le.s32.totalorder 1, %s16
      %p119 = scmp.lt.s32.totalorder %s16, 3
      %p120 = pnand %p118, %p119
      %p121 = pneg %p120
      // Predicated region
      $region9: #{tpu_custom_call.1} parent=5 // pred_check
        _
      $region10: #{tpu_custom_call.1} parent=5 // pred_check_branch
        %123 = sbr.rel (%p120) target = $region12
      $region11: #{tpu_custom_call.1} parent=5 // pred_region
        %s124 = ssub.s32 %s16, 1
        // Predicated region
        $region13: #{tpu_custom_call.1} parent=11 // pred_check
          %p125 = pneg %p63
        $region14: #{tpu_custom_call.1} parent=11 // pred_check_branch
          %127 = sbr.rel (%p125) target = $region16
        $region15: #{tpu_custom_call.1} parent=11 // pred_region
          %s129 = ssub.s32 3072, 3072
          %130 = vsyncadd [#allocation7], %s129
          %s131 = sshll.u32 [#allocation6], 4
          %s132 = int_to_ptr.vmem [resolvable:$true] %s131
          %137 = dma.hbm_to_vmem [thread:$0]  %s1, 3072, %s132, [#allocation7], 64, 64, 4
        $region16: #{tpu_custom_call.1} parent=11 // pred_fallthru
          _
        // Predicated region
        $region17: #{tpu_custom_call.1} parent=11 // pred_check
          %p138 = pneg %p84
        $region18: #{tpu_custom_call.1} parent=11 // pred_check_branch
          %140 = sbr.rel (%p138) target = $region20
        $region19: #{tpu_custom_call.1} parent=11 // pred_region
          _
        $region20: #{tpu_custom_call.1} parent=11 // pred_fallthru
          _
      $region12: #{tpu_custom_call.1} parent=5 // pred_fallthru
        _
      %p141 = scmp.lt.s32.totalorder %s16, 2
      // Predicated region
      $region21: #{tpu_custom_call.1} parent=5 // pred_check
        %p142 = pneg %p141
      $region22: #{tpu_custom_call.1} parent=5 // pred_check_branch
        %144 = sbr.rel (%p142) target = $region24
      $region23: #{tpu_custom_call.1} parent=5 // pred_region
        // Predicated region
        $region25: #{tpu_custom_call.1} parent=23 // pred_check
          %p145 = pneg %p36
        $region26: #{tpu_custom_call.1} parent=23 // pred_check_branch
          %147 = sbr.rel (%p145) target = $region28
        $region27: #{tpu_custom_call.1} parent=23 // pred_region
          %s148 = sand.u32 %s26, 1
          %s149 = scalar_lea.sflag [#allocation4], %s148
          %s150 = sand.u32 %s26, 1
          %s151 = smul.addr %s150, 16
          %s152 = scalar_lea.vmem [#allocation3], %s151
          %s153 = smul.u32 2, %s16
          %s155 = ssub.s32 256, 256
          %156 = vsyncadd %s149, %s155
          %s157 = smul.addr %s153, 128
          %s158 = scalar_lea.hbm %s0, %s157
          %s159 = sshll.u32 %s152, 4
          %s160 = int_to_ptr.vmem [resolvable:$true] %s159
          %165 = dma.hbm_to_vmem [thread:$0]  %s158, 256, %s160, %s149, 128, 128, 8
        $region28: #{tpu_custom_call.1} parent=23 // pred_fallthru
          _
      $region24: #{tpu_custom_call.1} parent=5 // pred_fallthru
        _
      %p166 = scmp.le.s32.totalorder 1, %s16
      %p167 = scmp.lt.s32.totalorder %s16, 3
      %p168 = pnand %p166, %p167
      %p169 = pneg %p168
      // Predicated region
      $region29: #{tpu_custom_call.1} parent=5 // pred_check
        _
      $region30: #{tpu_custom_call.1} parent=5 // pred_check_branch
        %171 = sbr.rel (%p168) target = $region32
      $region31: #{tpu_custom_call.1} parent=5 // pred_region
        %s172 = ssub.s32 %s16, 1
        %s173 = sand.u32 %s29, 1
        %s174 = scalar_lea.sflag [#allocation4], %s173
        %s175 = sand.u32 %s29, 1
        %s176 = smul.addr %s175, 16
        %s177 = scalar_lea.vmem [#allocation3], %s176
        // Predicated region
        $region33: #{tpu_custom_call.1} parent=31 // pred_check
          %p178 = pneg %p42
        $region34: #{tpu_custom_call.1} parent=31 // pred_check_branch
          %180 = sbr.rel (%p178) target = $region36
        $region35: #{tpu_custom_call.1} parent=31 // pred_region
          %181 = dma.done %s174, 256
        $region36: #{tpu_custom_call.1} parent=31 // pred_fallthru
          _
        // Predicated region
        $region37: #{tpu_custom_call.1} parent=31 // pred_check
          %p182 = pneg %p63
        $region38: #{tpu_custom_call.1} parent=31 // pred_check_branch
          %184 = sbr.rel (%p182) target = $region40
        $region39: #{tpu_custom_call.1} parent=31 // pred_region
          %185 = dma.done [#allocation7], 3072
        $region40: #{tpu_custom_call.1} parent=31 // pred_fallthru
          _
        %s186 = sand.u32 %s29, 1
        %s187 = scalar_lea.sflag [#allocation4], %s186
        %s188 = sand.u32 %s29, 1
        %s189 = smul.addr %s188, 16
        %s190 = scalar_lea.vmem [#allocation3], %s189
        %p191 = pneg %p42
        %p192 = pneg %p39
        %p193 = pneg %p63
        %p194 = pneg %p60
        %p195 = pneg %p84
        %p196 = pneg %p81
        %p197 = pneg %p110
        %p198 = pneg %p107
        %s199 = sand.u32 %s97, 1
        %s200 = scalar_lea.sflag [#allocation5], %s199
        %s201 = sand.u32 %s97, 1
        %s202 = smul.addr %s201, 16
        %s203 = scalar_lea.vmem [#allocation8], %s202
        %s204 = smul.u32 2, %s21
        %s205 = smul.u32 2, %s21
        %v207 = vld [vmem:[%s177] sm:$0xff]
        %v208 = vld [vmem:[%s177 + $0x8] sm:$0xff]
        %v209 = vpack.c.bf16 %v208, %v207
        %v211 = vshrl.u32 %v209, 16
        %v213 = vrot.slane %v211, 7
        %v214 = vshll.u32 %v209, 16
        %v216 = vor.u32 %v213, %v214
        %vm218 = vcmask 1040384
        %vm219 = vsmask.f32 256
        %vm220 = vmand %vm218, %vm219
        %v221 = vsel %vm220, 0, %v216
        %vm222 = vcmask 523264
        %v225 = vsel %vm222, %v221, 0
        %v227 = vunpack.c.l.b16 %v225
        %v228 = vunpack.c.h.b16 %v225
        %v229 = vpack.c.b16 %v227, %v227
        %v230 = vpack.c.b16 %v228, %v228
        %233 = vst [vmem:[#allocation2] sm:$0xf] %v229
        %234 = vst [vmem:[#allocation2 + $0xc] sm:$0xf] %v230
        %v235 = vsel %vm222, %v209, 0
        %v237 = vunpack.c.l.b16 %v235
        %v238 = vunpack.c.h.b16 %v235
        %v239 = vpack.c.b16 %v237, %v237
        %v240 = vpack.c.b16 %v238, %v238
        %243 = vst [vmem:[#allocation2 + $0x4] sm:$0xf] %v239
        %244 = vst [vmem:[#allocation2 + $0x10] sm:$0xf] %v240
        %v245 = vrot.slane %v214, 1
        %v246 = vor.u32 %v211, %v245
        %vm248 = vcmask 1047552
        %vm249 = vsmask.f32 7424
        %vm250 = vmand %vm248, %vm249
        %v251 = vsel %vm250, %v246, 0
        %v253 = vsel %vm222, %v251, 0
        %v255 = vunpack.c.l.b16 %v253
        %v256 = vunpack.c.h.b16 %v253
        %v257 = vpack.c.b16 %v255, %v255
        %v258 = vpack.c.b16 %v256, %v256
        %261 = vst [vmem:[#allocation2 + $0x8] sm:$0xf] %v257
        %262 = vst [vmem:[#allocation2 + $0x14] sm:$0xf] %v258
        %v263 = vld [vmem:[#allocation2] sm:$0xff]
        %v264 = vld [vmem:[#allocation2 + $0x8] sm:$0xf]
        %v265 = vld [vmem:[#allocation2 + $0xc] sm:$0xff]
        %v266 = vld [vmem:[#allocation2 + $0x14] sm:$0xf]
        %v267 = vld [vmem:[#allocation6] sm:$0xf]
        %v268 = vld [vmem:[#allocation6 + $0x4] sm:$0xf]
        %v269 = vld [vmem:[#allocation6 + $0x8] sm:$0xf]
        %v270 = vld [vmem:[#allocation6 + $0xc] sm:$0xf]
        %v271 = vld [vmem:[#allocation6 + $0x10] sm:$0xf]
        %v272 = vld [vmem:[#allocation6 + $0x14] sm:$0xf]
        %v273 = vld [vmem:[#allocation6 + $0x18] sm:$0xf]
        %v274 = vld [vmem:[#allocation6 + $0x1c] sm:$0xf]
        %v275 = vld [vmem:[#allocation6 + $0x20] sm:$0xf]
        %v276 = vld [vmem:[#allocation6 + $0x24] sm:$0xf]
        %v277 = vld [vmem:[#allocation6 + $0x28] sm:$0xf]
        %v278 = vld [vmem:[#allocation6 + $0x2c] sm:$0xf]
        %v279 = vld [vmem:[#allocation6 + $0x30] sm:$0xf]
        %v280 = vld [vmem:[#allocation6 + $0x34] sm:$0xf]
        %v281 = vld [vmem:[#allocation6 + $0x38] sm:$0xf]
        %v282 = vld [vmem:[#allocation6 + $0x3c] sm:$0xf]
        %v283 = vld [vmem:[#allocation6 + $0x40] sm:$0xf]
        %v284 = vld [vmem:[#allocation6 + $0x44] sm:$0xf]
        %v285 = vld [vmem:[#allocation6 + $0x48] sm:$0xf]
        %v286 = vld [vmem:[#allocation6 + $0x4c] sm:$0xf]
        %v287 = vld [vmem:[#allocation6 + $0x50] sm:$0xf]
        %v288 = vld [vmem:[#allocation6 + $0x54] sm:$0xf]
        %v289 = vld [vmem:[#allocation6 + $0x58] sm:$0xf]
        %v290 = vld [vmem:[#allocation6 + $0x5c] sm:$0xf]
        %v291 = vld [vmem:[#allocation6 + $0x60] sm:$0xf]
        %v292 = vld [vmem:[#allocation6 + $0x64] sm:$0xf]
        %v293 = vld [vmem:[#allocation6 + $0x68] sm:$0xf]
        %v294 = vld [vmem:[#allocation6 + $0x6c] sm:$0xf]
        %v295 = vld [vmem:[#allocation6 + $0x70] sm:$0xf]
        %v296 = vld [vmem:[#allocation6 + $0x74] sm:$0xf]
        %v297 = vld [vmem:[#allocation6 + $0x78] sm:$0xf]
        %v298 = vld [vmem:[#allocation6 + $0x7c] sm:$0xf]
        %v299 = vld [vmem:[#allocation6 + $0x80] sm:$0xf]
        %v300 = vld [vmem:[#allocation6 + $0x84] sm:$0xf]
        %v301 = vld [vmem:[#allocation6 + $0x88] sm:$0xf]
        %v302 = vld [vmem:[#allocation6 + $0x8c] sm:$0xf]
        %v303 = vld [vmem:[#allocation6 + $0x90] sm:$0xf]
        %v304 = vld [vmem:[#allocation6 + $0x94] sm:$0xf]
        %v305 = vld [vmem:[#allocation6 + $0x98] sm:$0xf]
        %v306 = vld [vmem:[#allocation6 + $0x9c] sm:$0xf]
        %v307 = vld [vmem:[#allocation6 + $0xa0] sm:$0xf]
        %v308 = vld [vmem:[#allocation6 + $0xa4] sm:$0xf]
        %v309 = vld [vmem:[#allocation6 + $0xa8] sm:$0xf]
        %v310 = vld [vmem:[#allocation6 + $0xac] sm:$0xf]
        %v311 = vld [vmem:[#allocation6 + $0xb0] sm:$0xf]
        %v312 = vld [vmem:[#allocation6 + $0xb4] sm:$0xf]
        %v313 = vld [vmem:[#allocation6 + $0xb8] sm:$0xf]
        %v314 = vld [vmem:[#allocation6 + $0xbc] sm:$0xf]
        %v315 = vld [vmem:[%s2] sm:$0x1]
        %v317 = vlaneseq
        %v318 = vshrl.u32 %v317, 7
        %v319 = vsub.s32 0, %v318
        %v320 = vrot.slane %v315, %v319
        %v326 = vunpack.c.l.b16 %v263
        %v327 = vunpack.c.h.b16 %v263
        %v328 = vunpack.c.l.b16 %v264
        %v329 = vunpack.c.l.b16 %v265
        %v330 = vunpack.c.h.b16 %v265
        %v331 = vunpack.c.l.b16 %v266
        %v332 = vpack.c.b16 %v329, %v326
        %v333 = vpack.c.b16 %v330, %v327
        %v334 = vpack.c.b16 %v331, %v328
        %v386 = vunpack.c.l.b16 %v267
        %v387 = vunpack.c.l.b16 %v268
        %v388 = vunpack.c.l.b16 %v269
        %v389 = vunpack.c.l.b16 %v270
        %v390 = vunpack.c.l.b16 %v271
        %v391 = vunpack.c.l.b16 %v272
        %v392 = vunpack.c.l.b16 %v273
        %v393 = vunpack.c.l.b16 %v274
        %v394 = vunpack.c.l.b16 %v275
        %v395 = vunpack.c.l.b16 %v276
        %v396 = vunpack.c.l.b16 %v277
        %v397 = vunpack.c.l.b16 %v278
        %v398 = vunpack.c.l.b16 %v279
        %v399 = vunpack.c.l.b16 %v280
        %v400 = vunpack.c.l.b16 %v281
        %v401 = vunpack.c.l.b16 %v282
        %v402 = vunpack.c.l.b16 %v283
        %v403 = vunpack.c.l.b16 %v284
        %v404 = vunpack.c.l.b16 %v285
        %v405 = vunpack.c.l.b16 %v286
        %v406 = vunpack.c.l.b16 %v287
        %v407 = vunpack.c.l.b16 %v288
        %v408 = vunpack.c.l.b16 %v289
        %v409 = vunpack.c.l.b16 %v290
        %v410 = vunpack.c.l.b16 %v291
        %v411 = vunpack.c.l.b16 %v292
        %v412 = vunpack.c.l.b16 %v293
        %v413 = vunpack.c.l.b16 %v294
        %v414 = vunpack.c.l.b16 %v295
        %v415 = vunpack.c.l.b16 %v296
        %v416 = vunpack.c.l.b16 %v297
        %v417 = vunpack.c.l.b16 %v298
        %v418 = vunpack.c.l.b16 %v299
        %v419 = vunpack.c.l.b16 %v300
        %v420 = vunpack.c.l.b16 %v301
        %v421 = vunpack.c.l.b16 %v302
        %v422 = vunpack.c.l.b16 %v303
        %v423 = vunpack.c.l.b16 %v304
        %v424 = vunpack.c.l.b16 %v305
        %v425 = vunpack.c.l.b16 %v306
        %v426 = vunpack.c.l.b16 %v307
        %v427 = vunpack.c.l.b16 %v308
        %v428 = vunpack.c.l.b16 %v309
        %v429 = vunpack.c.l.b16 %v310
        %v430 = vunpack.c.l.b16 %v311
        %v431 = vunpack.c.l.b16 %v312
        %v432 = vunpack.c.l.b16 %v313
        %v433 = vunpack.c.l.b16 %v314
        %v434 = vpack.c.b16 %v387, %v386
        %v435 = vpack.c.b16 %v389, %v388
        %v436 = vpack.c.b16 %v391, %v390
        %v437 = vpack.c.b16 %v393, %v392
        %v438 = vpack.c.b16 %v395, %v394
        %v439 = vpack.c.b16 %v397, %v396
        %v440 = vpack.c.b16 %v399, %v398
        %v441 = vpack.c.b16 %v401, %v400
        %v442 = vpack.c.b16 %v403, %v402
        %v443 = vpack.c.b16 %v405, %v404
        %v444 = vpack.c.b16 %v407, %v406
        %v445 = vpack.c.b16 %v409, %v408
        %v446 = vpack.c.b16 %v411, %v410
        %v447 = vpack.c.b16 %v413, %v412
        %v448 = vpack.c.b16 %v415, %v414
        %v449 = vpack.c.b16 %v417, %v416
        %v450 = vpack.c.b16 %v419, %v418
        %v451 = vpack.c.b16 %v421, %v420
        %v452 = vpack.c.b16 %v423, %v422
        %v453 = vpack.c.b16 %v425, %v424
        %v454 = vpack.c.b16 %v427, %v426
        %v455 = vpack.c.b16 %v429, %v428
        %v456 = vpack.c.b16 %v431, %v430
        %v457 = vpack.c.b16 %v433, %v432
        %482 = vmatprep.subr.bf16.mxu0 0
        %483 = vmatpush1.bf16.msra.mxu0 %v441
        %484 = vmatprep.subr.bf16.mxu0 0
        %485 = vmatpush1.bf16.msra.mxu0 %v440
        %486 = vmatprep.subr.bf16.mxu0 0
        %487 = vmatpush1.bf16.msra.mxu0 %v439
        %488 = vmatprep.subr.bf16.mxu0 0
        %489 = vmatpush1.bf16.msra.mxu0 %v438
        %490 = vmatprep.subr.bf16.mxu0 0
        %491 = vmatpush1.bf16.msra.mxu0 %v437
        %492 = vmatprep.subr.bf16.mxu0 0
        %493 = vmatpush1.bf16.msra.mxu0 %v436
        %494 = vmatprep.subr.bf16.mxu0 0
        %495 = vmatpush1.bf16.msra.mxu0 %v435
        %496 = vmatprep.subr.bf16.mxu0 0
        %497 = vmatpush1.bf16.msra.mxu0 %v434
        %498 = vmatprep.subr.bf16.mxu0 0
        %499 = vmatpush2.bf16.msra.mxu0 %v449
        %500 = vmatprep.subr.bf16.mxu0 0
        %501 = vmatpush2.bf16.msra.mxu0 %v448
        %502 = vmatprep.subr.bf16.mxu0 0
        %503 = vmatpush2.bf16.msra.mxu0 %v447
        %504 = vmatprep.subr.bf16.mxu0 0
        %505 = vmatpush2.bf16.msra.mxu0 %v446
        %506 = vmatprep.subr.bf16.mxu0 0
        %507 = vmatpush2.bf16.msra.mxu0 %v445
        %508 = vmatprep.subr.bf16.mxu0 0
        %509 = vmatpush2.bf16.msra.mxu0 %v444
        %510 = vmatprep.subr.bf16.mxu0 0
        %511 = vmatpush2.bf16.msra.mxu0 %v443
        %512 = vmatprep.subr.bf16.mxu0 0
        %513 = vmatpush2.bf16.msra.mxu0 %v442
        %514 = vmatprep.mubr.bf16.mxu0 %v333
        %515 = vmatmul.mubr.bf16.gmra.mxu0 %v332
        %v516 = vpop.f32.mrf.mxu0
        %v517 = vadd.f32 %v320, %v516
        %v518 = vpop.f32.mrf.mxu0
        %v519 = vpop.f32.mrf.mxu0
        %v520 = vadd.f32 %v320, %v519
        %v521 = vpop.f32.mrf.mxu0
        %522 = vdwg.mxu0
        %523 = vmatprep.subr.bf16.mxu0 0
        %524 = vmatpush1.bf16.msra.mxu0 %v457
        %525 = vmatprep.subr.bf16.mxu0 0
        %526 = vmatpush1.bf16.msra.mxu0 %v456
        %527 = vmatprep.subr.bf16.mxu0 0
        %528 = vmatpush1.bf16.msra.mxu0 %v455
        %529 = vmatprep.subr.bf16.mxu0 0
        %530 = vmatpush1.bf16.msra.mxu0 %v454
        %531 = vmatprep.subr.bf16.mxu0 0
        %532 = vmatpush1.bf16.msra.mxu0 %v453
        %533 = vmatprep.subr.bf16.mxu0 0
        %534 = vmatpush1.bf16.msra.mxu0 %v452
        %535 = vmatprep.subr.bf16.mxu0 0
        %536 = vmatpush1.bf16.msra.mxu0 %v451
        %537 = vmatprep.subr.bf16.mxu0 0
        %538 = vmatpush1.bf16.msra.mxu0 %v450
        %539 = vmatprep.subr.bf16.mxu0 0
        %540 = vmatpush2.bf16.msra.mxu0 0
        %541 = vmatprep.subr.bf16.mxu0 0
        %542 = vmatpush2.bf16.msra.mxu0 0
        %543 = vmatprep.subr.bf16.mxu0 0
        %544 = vmatpush2.bf16.msra.mxu0 0
        %545 = vmatprep.subr.bf16.mxu0 0
        %546 = vmatpush2.bf16.msra.mxu0 0
        %547 = vmatprep.subr.bf16.mxu0 0
        %548 = vmatpush2.bf16.msra.mxu0 0
        %549 = vmatprep.subr.bf16.mxu0 0
        %550 = vmatpush2.bf16.msra.mxu0 0
        %551 = vmatprep.subr.bf16.mxu0 0
        %552 = vmatpush2.bf16.msra.mxu0 0
        %553 = vmatprep.subr.bf16.mxu0 0
        %554 = vmatpush2.bf16.msra.mxu0 0
        %555 = vmatprep.mubr.bf16.mxu0 0
        %556 = vmatmul.mubr.bf16.gmra.mxu0 %v334
        %v557 = vpop.f32.mrf.mxu0
        %v558 = vadd.f32 %v517, %v557
        %v559 = vpop.f32.mrf.mxu0
        %v560 = vpop.f32.mrf.mxu0
        %v561 = vadd.f32 %v520, %v560
        %v562 = vpop.f32.mrf.mxu0
        %563 = vdwg.mxu0
        %v564 = vmax.f32 %v558, 0.0
        %v565 = vmax.f32 %v561, 0.0
        %566 = vst [vmem:[%s203] sm:$0xff] %v564
        %567 = vst [vmem:[%s203 + $0x8] sm:$0xff] %v565
        %s568 = sand.u32 %s97, 1
        %s569 = scalar_lea.sflag [#allocation5], %s568
        %s570 = sand.u32 %s97, 1
        %s571 = smul.addr %s570, 16
        %s572 = scalar_lea.vmem [#allocation8], %s571
        // Predicated region
        $region41: #{tpu_custom_call.1} parent=31 // pred_check
          %p573 = pneg %p107
        $region42: #{tpu_custom_call.1} parent=31 // pred_check_branch
          %575 = sbr.rel (%p573) target = $region44
        $region43: #{tpu_custom_call.1} parent=31 // pred_region
          %s576 = smul.u32 2, %s21
          %s578 = ssub.s32 256, 256
          %579 = vsyncadd %s569, %s578
          %s580 = smul.addr %s576, 128
          %s581 = scalar_lea.hbm %s3, %s580
          %s582 = sshll.u32 %s572, 4
          %s583 = int_to_ptr.vmem [resolvable:$true] %s582
          %588 = dma.vmem_to_hbm [thread:$0]  %s583, 256, %s581, %s569, 128, 128, 8
        $region44: #{tpu_custom_call.1} parent=31 // pred_fallthru
          _
      $region32: #{tpu_custom_call.1} parent=5 // pred_fallthru
        _
      %p589 = scmp.le.s32.totalorder 2, %s16
      // Predicated region
      $region45: #{tpu_custom_call.1} parent=5 // pred_check
        %p590 = pneg %p589
      $region46: #{tpu_custom_call.1} parent=5 // pred_check_branch
        %592 = sbr.rel (%p590) target = $region48
      $region47: #{tpu_custom_call.1} parent=5 // pred_region
        %s593 = ssub.s32 %s16, 2
        // Predicated region
        $region49: #{tpu_custom_call.1} parent=47 // pred_check
          %p594 = pneg %p113
        $region50: #{tpu_custom_call.1} parent=47 // pred_check_branch
          %596 = sbr.rel (%p594) target = $region52
        $region51: #{tpu_custom_call.1} parent=47 // pred_region
          %s597 = sand.u32 %s98, 1
          %s598 = scalar_lea.sflag [#allocation5], %s597
          %s599 = sand.u32 %s98, 1
          %s600 = smul.addr %s599, 16
          %s601 = scalar_lea.vmem [#allocation8], %s600
          %602 = dma.done %s598, 256
        $region52: #{tpu_custom_call.1} parent=47 // pred_fallthru
          _
      $region48: #{tpu_custom_call.1} parent=5 // pred_fallthru
        _
    $region6: #{tpu_custom_call.1} parent=1 // loop_footer
      %s20 = sadd.s32 1, %s16
    $region7: #{tpu_custom_call.1} parent=1 // loop_footer_branch
      %15 = sbr.rel target = $region3
    $region8: #{tpu_custom_call.1} parent=1 // loop_exit
      _
    %603 = vsyncpa [#allocation4], 1
    %s604 = scalar_lea.sflag [#allocation4], 1
    %605 = vsyncpa %s604, 1
    %606 = vsyncpa [#allocation7], 1
    %607 = vsyncpa [#allocation5], 1
    %s608 = scalar_lea.sflag [#allocation5], 1
    %609 = vsyncpa %s608, 1

</llo_original>
